<compile_context>
chip_gen: v7x
topology: tpu7x:2x2x1
jax: 0.10.0
libtpu: 0.0.40
codegen_flags: <defaults>
</compile_context>

<pallas_src>
import functools

import jax
import jax.numpy as jnp
from jax.experimental import pallas as pl
from jax.experimental.pallas import tpu as pltpu

DROP_P = 0.2
DIV_CONST = 0.001


def _model_kernel(qb_ref, kbt_ref, wt_ref, b_ref, rnd_ref, vbp_ref, out_ref):
    # mat = qb @ kb.T   (kb pre-transposed in the wrapper -> plain dot)
    mat = jnp.dot(qb_ref[...], kbt_ref[...], preferred_element_type=jnp.float32)

    # Linear + /0.001 + dropout rescale, all folded into wt / b in the wrapper:
    #   f = (mat @ w.T + b) * 1000 * 1/(1-p)
    f = jnp.dot(mat, wt_ref[...], preferred_element_type=jnp.float32) + b_ref[...]

    # dropout(p=0.2): keep iff uniform >= p (rescale already folded into f)
    keep = rnd_ref[...] >= jnp.float32(DROP_P)
    d1 = jnp.where(keep, f, jnp.float32(0.0))

    # output = d1 @ vb   (vb zero-padded to a lane-dense last dim)
    out_ref[...] = jnp.dot(d1, vbp_ref[...], preferred_element_type=jnp.float32)


@jax.jit
def model_forward(qb, kb, vb, w, b, drop_key):
    M = qb.shape[0]
    N = vb.shape[1]
    n_feat = w.shape[0]  # 100

    # Fold the constants: /0.001 and the dropout 1/(1-p) scale are both linear
    # and applied before the final matmul, so bake them into the Linear params.
    scale = jnp.float32((1.0 / DIV_CONST) * (1.0 / (1.0 - DROP_P)))  # 1250
    kbt = jnp.transpose(kb).astype(jnp.float32)              # (D, S)
    wt = (jnp.transpose(w) * scale).astype(jnp.float32)      # (100, 100)
    b2 = (b * scale).reshape(1, -1).astype(jnp.float32)      # (1, 100)

    # Dropout uniforms generated host-side (interpret-mode safe, same Bernoulli
    # keep-prob semantics as torch.nn.functional.dropout in training mode).
    rnd = jax.random.uniform(drop_key, (M, n_feat), dtype=jnp.float32)

    # Lane-dense output: pad vb's last dim up to a multiple of 128 with zeros.
    n_pad = ((N + 127) // 128) * 128
    vbp = jnp.pad(vb.astype(jnp.float32), ((0, 0), (0, n_pad - N)))

    vmem = pl.BlockSpec(memory_space=pltpu.MemorySpace.VMEM)

    out_padded = pl.pallas_call(
        _model_kernel,
        out_shape=jax.ShapeDtypeStruct((M, n_pad), jnp.float32),
        in_specs=[vmem, vmem, vmem, vmem, vmem, vmem],
        out_specs=vmem,
    )(qb.astype(jnp.float32), kbt, wt, b2, rnd, vbp)

    return out_padded[:, :N]


if __name__ == "__main__":
    key = jax.random.PRNGKey(0)
    k_qb, k_kb, k_vb, k_w, k_b, k_drop = jax.random.split(key, 6)

    # Small shapes consistent with the forward pass (Linear fixes S = 100).
    M, D, S, N = 64, 32, 100, 48

    qb = jax.random.normal(k_qb, (M, D), dtype=jnp.float32)
    kb = jax.random.normal(k_kb, (S, D), dtype=jnp.float32)
    vb = jax.random.normal(k_vb, (S, N), dtype=jnp.float32)

    # Deterministic Linear(100, 100) params (PyTorch-style uniform init bounds).
    bound = 1.0 / jnp.sqrt(jnp.float32(100.0))
    w = jax.random.uniform(k_w, (100, 100), dtype=jnp.float32,
                           minval=-bound, maxval=bound)
    b = jax.random.uniform(k_b, (100,), dtype=jnp.float32,
                           minval=-bound, maxval=bound)

    out = model_forward(qb, kb, vb, w, b, k_drop)
    jax.block_until_ready(out)
    assert out.shape == (M, N), out.shape
    print("KERNEL_OK")
</pallas_src>

<mosaic_0001>
module attributes {stable_mosaic.version = 11 : i64} {
  func.func @_model_kernel(%arg0: memref<64x32xf32, #tpu.memory_space<vmem>>, %arg1: memref<32x100xf32, #tpu.memory_space<vmem>>, %arg2: memref<100x100xf32, #tpu.memory_space<vmem>>, %arg3: memref<1x100xf32, #tpu.memory_space<vmem>>, %arg4: memref<64x100xf32, #tpu.memory_space<vmem>>, %arg5: memref<100x128xf32, #tpu.memory_space<vmem>>, %arg6: memref<64x128xf32, #tpu.memory_space<vmem>>) attributes {dimension_semantics = [], scalar_prefetch = 0 : i64, scratch_operands = 0 : i64, tpu.core_type = #tpu.core_type<tc>} {
    %c0 = arith.constant 0 : index
    %c0_0 = arith.constant 0 : index
    %0 = vector.load %arg0[%c0, %c0_0] : memref<64x32xf32, #tpu.memory_space<vmem>>, vector<64x32xf32>
    %c0_1 = arith.constant 0 : index
    %c0_2 = arith.constant 0 : index
    %1 = vector.load %arg1[%c0_1, %c0_2] : memref<32x100xf32, #tpu.memory_space<vmem>>, vector<32x100xf32>
    %cst = arith.constant dense<0.000000e+00> : vector<64x100xf32>
    %2 = tpu.matmul %0, %1, %cst {dimension_numbers = #tpu.dot_dimension_numbers<[1], [0], [0], [1], [0, 0, 1, 1], [], []>} : vector<64x32xf32>, vector<32x100xf32>, vector<64x100xf32> -> vector<64x100xf32>
    %c0_3 = arith.constant 0 : index
    %c0_4 = arith.constant 0 : index
    %3 = vector.load %arg2[%c0_3, %c0_4] : memref<100x100xf32, #tpu.memory_space<vmem>>, vector<100x100xf32>
    %cst_5 = arith.constant dense<0.000000e+00> : vector<64x100xf32>
    %4 = tpu.matmul %2, %3, %cst_5 {dimension_numbers = #tpu.dot_dimension_numbers<[1], [0], [0], [1], [0, 0, 1, 1], [], []>} : vector<64x100xf32>, vector<100x100xf32>, vector<64x100xf32> -> vector<64x100xf32>
    %c0_6 = arith.constant 0 : index
    %c0_7 = arith.constant 0 : index
    %5 = vector.load %arg3[%c0_6, %c0_7] : memref<1x100xf32, #tpu.memory_space<vmem>>, vector<1x100xf32>
    %6 = vector.broadcast %5 : vector<1x100xf32> to vector<64x100xf32>
    %7 = arith.addf %4, %6 : vector<64x100xf32>
    %c0_8 = arith.constant 0 : index
    %c0_9 = arith.constant 0 : index
    %8 = vector.load %arg4[%c0_8, %c0_9] : memref<64x100xf32, #tpu.memory_space<vmem>>, vector<64x100xf32>
    %cst_10 = arith.constant 2.000000e-01 : f32
    %9 = vector.broadcast %cst_10 : f32 to vector<64x100xf32>
    %10 = arith.cmpf oge, %8, %9 : vector<64x100xf32>
    %cst_11 = arith.constant 0.000000e+00 : f32
    %11 = vector.broadcast %cst_11 : f32 to vector<64x100xf32>
    %12 = arith.select %10, %7, %11 : vector<64x100xi1>, vector<64x100xf32>
    %c0_12 = arith.constant 0 : index
    %c0_13 = arith.constant 0 : index
    %13 = vector.load %arg5[%c0_12, %c0_13] : memref<100x128xf32, #tpu.memory_space<vmem>>, vector<100x128xf32>
    %cst_14 = arith.constant dense<0.000000e+00> : vector<64x128xf32>
    %14 = tpu.matmul %12, %13, %cst_14 {dimension_numbers = #tpu.dot_dimension_numbers<[1], [0], [0], [1], [0, 0, 1, 1], [], []>} : vector<64x100xf32>, vector<100x128xf32>, vector<64x128xf32> -> vector<64x128xf32>
    %c0_15 = arith.constant 0 : index
    %c0_16 = arith.constant 0 : index
    %15 = vector.load %arg6[%c0_15, %c0_16] : memref<64x128xf32, #tpu.memory_space<vmem>>, vector<64x128xf32>
    tpu.vector_store %arg6[%c0_15, %c0_16], %14 {strides = array<i32>} : memref<64x128xf32, #tpu.memory_space<vmem>>, vector<64x128xf32>,
    return
  }
}

</mosaic_0001>

<llo_original>
// kernel: model_forward.1
$region0: #{model_forward.1}
  #allocation0 [shape = 'u32[]', space=smem, size = 0x4, offset = 0x4, fixed_abs, tag = 'smem constant byte address 0x4 - core index']
  #allocation1 [shape = 'u32[144,128]{1,0:T(1,128)}', space=vmem, size = 0x12000, scoped, tag = 'internal scratch']
  %s0 = inlined_call_operand.vmem [shape: f32[64,32], index: 0, kind: input, shape index: {}]
  %s1 = inlined_call_operand.vmem [shape: f32[32,100], index: 1, kind: input, shape index: {}]
  %s2 = inlined_call_operand.vmem [shape: f32[100,100], index: 2, kind: input, shape index: {}]
  %s3 = inlined_call_operand.vmem [shape: f32[1,100], index: 3, kind: input, shape index: {}]
  %s4 = inlined_call_operand.vmem [shape: f32[64,100], index: 4, kind: input, shape index: {}]
  %s5 = inlined_call_operand.vmem [shape: f32[100,128], index: 5, kind: input, shape index: {}]
  %s6 = inlined_call_operand.vmem [shape: f32[64,128], index: 6, kind: output, shape index: {}]
  %s7 = sld [smem:[#allocation0]]
  $region34: #{model_forward.1} parent=0
    _
  %s9 = ssub.s32 1, %s7
  %s10 = scalar_select 0, %s9, %s7
  // Predicated region
  $region2: #{model_forward.1} parent=0 // pred_check
    _
  $region3: #{model_forward.1} parent=0 // pred_check_branch
    %12 = sbr.rel (0) target = $region5
  $region4: #{model_forward.1} parent=0 // pred_region
    _
  $region5: #{model_forward.1} parent=0 // pred_fallthru
    _
  // Predicated region
  $region6: #{model_forward.1} parent=0 // pred_check
    _
  $region7: #{model_forward.1} parent=0 // pred_check_branch
    %14 = sbr.rel (0) target = $region9
  $region8: #{model_forward.1} parent=0 // pred_region
    _
  $region9: #{model_forward.1} parent=0 // pred_fallthru
    _
  // Predicated region
  $region10: #{model_forward.1} parent=0 // pred_check
    _
  $region11: #{model_forward.1} parent=0 // pred_check_branch
    %16 = sbr.rel (0) target = $region13
  $region12: #{model_forward.1} parent=0 // pred_region
    _
  $region13: #{model_forward.1} parent=0 // pred_fallthru
    _
  // Predicated region
  $region14: #{model_forward.1} parent=0 // pred_check
    _
  $region15: #{model_forward.1} parent=0 // pred_check_branch
    %18 = sbr.rel (0) target = $region17
  $region16: #{model_forward.1} parent=0 // pred_region
    _
  $region17: #{model_forward.1} parent=0 // pred_fallthru
    _
  // Predicated region
  $region18: #{model_forward.1} parent=0 // pred_check
    _
  $region19: #{model_forward.1} parent=0 // pred_check_branch
    %20 = sbr.rel (0) target = $region21
  $region20: #{model_forward.1} parent=0 // pred_region
    _
  $region21: #{model_forward.1} parent=0 // pred_fallthru
    _
  // Predicated region
  $region22: #{model_forward.1} parent=0 // pred_check
    _
  $region23: #{model_forward.1} parent=0 // pred_check_branch
    %22 = sbr.rel (0) target = $region25
  $region24: #{model_forward.1} parent=0 // pred_region
    _
  $region25: #{model_forward.1} parent=0 // pred_fallthru
    _
  %v23 = vld [vmem:[%s0] sm:$0xff]
  %v24 = vld [vmem:[%s0 + $0x8] sm:$0xff]
  %v25 = vld [vmem:[%s0 + $0x10] sm:$0xff]
  %v26 = vld [vmem:[%s0 + $0x18] sm:$0xff]
  %v27 = vld [vmem:[%s0 + $0x20] sm:$0xff]
  %v28 = vld [vmem:[%s0 + $0x28] sm:$0xff]
  %v29 = vld [vmem:[%s0 + $0x30] sm:$0xff]
  %v30 = vld [vmem:[%s0 + $0x38] sm:$0xff]
  %v31 = vld [vmem:[%s1] sm:$0xff]
  %v32 = vld [vmem:[%s1 + $0x8] sm:$0xff]
  %v33 = vld [vmem:[%s1 + $0x10] sm:$0xff]
  %v34 = vld [vmem:[%s1 + $0x18] sm:$0xff]
  %vm35 = vcmask 261120
  %v37 = vsel %vm35, %v23, 0
  %v40 = vsel %vm35, %v24, 0
  %v43 = vsel %vm35, %v25, 0
  %v46 = vsel %vm35, %v26, 0
  %v49 = vsel %vm35, %v27, 0
  %v52 = vsel %vm35, %v28, 0
  %v55 = vsel %vm35, %v29, 0
  %v58 = vsel %vm35, %v30, 0
  %60 = vmatprep.subr.mxu0 0.0
  %61 = vmatpush1.msra.mxu0 %v31
  %62 = vmatprep.subr.mxu0 0.0
  %63 = vmatpush1.msra.mxu0 %v32
  %64 = vmatprep.subr.mxu0 0.0
  %65 = vmatpush1.msra.mxu0 %v33
  %66 = vmatprep.subr.mxu0 0.0
  %67 = vmatpush1.msra.mxu0 %v34
  %68 = vmatprep.subr.mxu0 0.0
  %69 = vmatpush1.msra.mxu0 0.0
  %70 = vmatprep.subr.mxu0 0.0
  %71 = vmatpush1.msra.mxu0 0.0
  %72 = vmatprep.subr.mxu0 0.0
  %73 = vmatpush1.msra.mxu0 0.0
  %74 = vmatprep.subr.mxu0 0.0
  %75 = vmatpush1.msra.mxu0 0.0
  %76 = vmatprep.subr.mxu0 0.0
  %77 = vmatpush1.msra.mxu0 0.0
  %78 = vmatprep.subr.mxu0 0.0
  %79 = vmatpush1.msra.mxu0 0.0
  %80 = vmatprep.subr.mxu0 0.0
  %81 = vmatpush1.msra.mxu0 0.0
  %82 = vmatprep.subr.mxu0 0.0
  %83 = vmatpush1.msra.mxu0 0.0
  %84 = vmatprep.subr.mxu0 0.0
  %85 = vmatpush1.msra.mxu0 0.0
  %86 = vmatprep.subr.mxu0 0.0
  %87 = vmatpush1.msra.mxu0 0.0
  %88 = vmatprep.subr.mxu0 0.0
  %89 = vmatpush1.msra.mxu0 0.0
  %90 = vmatprep.subr.mxu0 0.0
  %91 = vmatpush1.msra.mxu0 0.0
  %92 = vmatprep.subr.mxu0 0.0
  %93 = vmatpush1.msra.mxu0 0.0
  %94 = vmatprep.subr.mxu0 0.0
  %95 = vmatpush1.msra.mxu0 0.0
  %96 = vmatprep.subr.mxu0 0.0
  %97 = vmatpush1.msra.mxu0 0.0
  %98 = vmatprep.subr.mxu0 0.0
  %99 = vmatpush1.msra.mxu0 0.0
  %100 = vmatprep.subr.mxu0 0.0
  %101 = vmatpush1.msra.mxu0 0.0
  %102 = vmatprep.subr.mxu0 0.0
  %103 = vmatpush1.msra.mxu0 0.0
  %104 = vmatprep.subr.mxu0 0.0
  %105 = vmatpush1.msra.mxu0 0.0
  %106 = vmatprep.subr.mxu0 0.0
  %107 = vmatpush1.msra.mxu0 0.0
  %108 = vmatprep.subr.mxu0 0.0
  %109 = vmatpush1.msra.mxu0 0.0
  %110 = vmatprep.subr.mxu0 0.0
  %111 = vmatpush1.msra.mxu0 0.0
  %112 = vmatprep.subr.mxu0 0.0
  %113 = vmatpush1.msra.mxu0 0.0
  %114 = vmatprep.subr.mxu0 0.0
  %115 = vmatpush1.msra.mxu0 0.0
  %116 = vmatprep.subr.mxu0 0.0
  %117 = vmatpush1.msra.mxu0 0.0
  %118 = vmatprep.subr.mxu0 0.0
  %119 = vmatpush1.msra.mxu0 0.0
  %120 = vmatprep.subr.mxu0 0.0
  %121 = vmatpush1.msra.mxu0 0.0
  %122 = vmatprep.subr.mxu0 0.0
  %123 = vmatpush1.msra.mxu0 0.0
  %124 = vmatprep.mubr.f32.mxu0 0.0
  %125 = vmatmul.mubr.f32.gmra.mrb[0].mxu0 %v37
  %v126 = vpop.f32.mrb[0].mxu0
  %v127 = vadd.f32 0.0, %v126
  %v128 = vpop.f32.mrb[0].mxu0
  %129 = vmatprep.mubr.f32.mxu0 0.0
  %130 = vmatmul.mubr.f32.gmra.mrb[0].mxu0 %v40
  %v131 = vpop.f32.mrb[0].mxu0
  %v132 = vadd.f32 0.0, %v131
  %v133 = vpop.f32.mrb[0].mxu0
  %134 = vmatprep.mubr.f32.mxu0 0.0
  %135 = vmatmul.mubr.f32.gmra.mrb[0].mxu0 %v43
  %v136 = vpop.f32.mrb[0].mxu0
  %v137 = vadd.f32 0.0, %v136
  %v138 = vpop.f32.mrb[0].mxu0
  %139 = vmatprep.mubr.f32.mxu0 0.0
  %140 = vmatmul.mubr.f32.gmra.mrb[0].mxu0 %v46
  %v141 = vpop.f32.mrb[0].mxu0
  %v142 = vadd.f32 0.0, %v141
  %v143 = vpop.f32.mrb[0].mxu0
  %144 = vmatprep.mubr.f32.mxu0 0.0
  %145 = vmatmul.mubr.f32.gmra.mrb[0].mxu0 %v49
  %v146 = vpop.f32.mrb[0].mxu0
  %v147 = vadd.f32 0.0, %v146
  %v148 = vpop.f32.mrb[0].mxu0
  %149 = vmatprep.mubr.f32.mxu0 0.0
  %150 = vmatmul.mubr.f32.gmra.mrb[0].mxu0 %v52
  %v151 = vpop.f32.mrb[0].mxu0
  %v152 = vadd.f32 0.0, %v151
  %v153 = vpop.f32.mrb[0].mxu0
  %154 = vmatprep.mubr.f32.mxu0 0.0
  %155 = vmatmul.mubr.f32.gmra.mrb[0].mxu0 %v55
  %v156 = vpop.f32.mrb[0].mxu0
  %v157 = vadd.f32 0.0, %v156
  %v158 = vpop.f32.mrb[0].mxu0
  %159 = vmatprep.mubr.f32.mxu0 0.0
  %160 = vmatmul.mubr.f32.gmra.mrb[0].mxu0 %v58
  %v161 = vpop.f32.mrb[0].mxu0
  %v162 = vadd.f32 0.0, %v161
  %v163 = vpop.f32.mrb[0].mxu0
  %164 = vdwg.mxu0
  %v165 = vld [vmem:[%s2] sm:$0xff]
  %v166 = vld [vmem:[%s2 + $0x8] sm:$0xff]
  %v167 = vld [vmem:[%s2 + $0x10] sm:$0xff]
  %v168 = vld [vmem:[%s2 + $0x18] sm:$0xff]
  %v169 = vld [vmem:[%s2 + $0x20] sm:$0xff]
  %v170 = vld [vmem:[%s2 + $0x28] sm:$0xff]
  %v171 = vld [vmem:[%s2 + $0x30] sm:$0xff]
  %v172 = vld [vmem:[%s2 + $0x38] sm:$0xff]
  %v173 = vld [vmem:[%s2 + $0x40] sm:$0xff]
  %v174 = vld [vmem:[%s2 + $0x48] sm:$0xff]
  %v175 = vld [vmem:[%s2 + $0x50] sm:$0xff]
  %v176 = vld [vmem:[%s2 + $0x58] sm:$0xff]
  %v177 = vld [vmem:[%s2 + $0x60] sm:$0xf]
  %v178 = vld [vmem:[%s3] sm:$0x1]
  %v180 = vlaneseq
  %v181 = vshrl.u32 %v180, 7
  %v182 = vsub.s32 0, %v181
  %v183 = vrot.slane %v178, %v182
  %vm185 = vcmask 818176
  %v187 = vsel %vm185, %v127, 0
  %v190 = vsel %vm185, %v132, 0
  %v193 = vsel %vm185, %v137, 0
  %v196 = vsel %vm185, %v142, 0
  %v199 = vsel %vm185, %v147, 0
  %v202 = vsel %vm185, %v152, 0
  %v205 = vsel %vm185, %v157, 0
  %v208 = vsel %vm185, %v162, 0
  %vm210 = vcmask 1043456
  %v212 = vsel %vm210, %v177, 0
  %214 = vmatprep.subr.mxu0 0.0
  %215 = vmatpush1.msra.mxu0 %v165
  %216 = vmatprep.subr.mxu0 0.0
  %217 = vmatpush1.msra.mxu0 %v166
  %218 = vmatprep.subr.mxu0 0.0
  %219 = vmatpush1.msra.mxu0 %v167
  %220 = vmatprep.subr.mxu0 0.0
  %221 = vmatpush1.msra.mxu0 %v168
  %222 = vmatprep.subr.mxu0 0.0
  %223 = vmatpush1.msra.mxu0 %v169
  %224 = vmatprep.subr.mxu0 0.0
  %225 = vmatpush1.msra.mxu0 %v170
  %226 = vmatprep.subr.mxu0 0.0
  %227 = vmatpush1.msra.mxu0 %v171
  %228 = vmatprep.subr.mxu0 0.0
  %229 = vmatpush1.msra.mxu0 %v172
  %230 = vmatprep.subr.mxu0 0.0
  %231 = vmatpush1.msra.mxu0 %v173
  %232 = vmatprep.subr.mxu0 0.0
  %233 = vmatpush1.msra.mxu0 %v174
  %234 = vmatprep.subr.mxu0 0.0
  %235 = vmatpush1.msra.mxu0 %v175
  %236 = vmatprep.subr.mxu0 0.0
  %237 = vmatpush1.msra.mxu0 %v176
  %238 = vmatprep.subr.mxu0 0.0
  %239 = vmatpush1.msra.mxu0 %v212
  %240 = vmatprep.subr.mxu0 0.0
  %241 = vmatpush1.msra.mxu0 0.0
  %242 = vmatprep.subr.mxu0 0.0
  %243 = vmatpush1.msra.mxu0 0.0
  %244 = vmatprep.subr.mxu0 0.0
  %245 = vmatpush1.msra.mxu0 0.0
  %246 = vmatprep.subr.mxu0 0.0
  %247 = vmatpush1.msra.mxu0 0.0
  %248 = vmatprep.subr.mxu0 0.0
  %249 = vmatpush1.msra.mxu0 0.0
  %250 = vmatprep.subr.mxu0 0.0
  %251 = vmatpush1.msra.mxu0 0.0
  %252 = vmatprep.subr.mxu0 0.0
  %253 = vmatpush1.msra.mxu0 0.0
  %254 = vmatprep.subr.mxu0 0.0
  %255 = vmatpush1.msra.mxu0 0.0
  %256 = vmatprep.subr.mxu0 0.0
  %257 = vmatpush1.msra.mxu0 0.0
  %258 = vmatprep.subr.mxu0 0.0
  %259 = vmatpush1.msra.mxu0 0.0
  %260 = vmatprep.subr.mxu0 0.0
  %261 = vmatpush1.msra.mxu0 0.0
  %262 = vmatprep.subr.mxu0 0.0
  %263 = vmatpush1.msra.mxu0 0.0
  %264 = vmatprep.subr.mxu0 0.0
  %265 = vmatpush1.msra.mxu0 0.0
  %266 = vmatprep.subr.mxu0 0.0
  %267 = vmatpush1.msra.mxu0 0.0
  %268 = vmatprep.subr.mxu0 0.0
  %269 = vmatpush1.msra.mxu0 0.0
  %270 = vmatprep.subr.mxu0 0.0
  %271 = vmatpush1.msra.mxu0 0.0
  %272 = vmatprep.subr.mxu0 0.0
  %273 = vmatpush1.msra.mxu0 0.0
  %274 = vmatprep.subr.mxu0 0.0
  %275 = vmatpush1.msra.mxu0 0.0
  %276 = vmatprep.subr.mxu0 0.0
  %277 = vmatpush1.msra.mxu0 0.0
  %278 = vmatprep.mubr.f32.mxu0 0.0
  %279 = vmatmul.mubr.f32.gmra.mrb[0].mxu0 %v187
  %v280 = vpop.f32.mrb[0].mxu0
  %v281 = vadd.f32 %v183, %v280
  %v282 = vpop.f32.mrb[0].mxu0
  %283 = vmatprep.mubr.f32.mxu0 0.0
  %284 = vmatmul.mubr.f32.gmra.mrb[0].mxu0 %v190
  %v285 = vpop.f32.mrb[0].mxu0
  %v286 = vadd.f32 %v183, %v285
  %v287 = vpop.f32.mrb[0].mxu0
  %288 = vmatprep.mubr.f32.mxu0 0.0
  %289 = vmatmul.mubr.f32.gmra.mrb[0].mxu0 %v193
  %v290 = vpop.f32.mrb[0].mxu0
  %v291 = vadd.f32 %v183, %v290
  %v292 = vpop.f32.mrb[0].mxu0
  %293 = vmatprep.mubr.f32.mxu0 0.0
  %294 = vmatmul.mubr.f32.gmra.mrb[0].mxu0 %v196
  %v295 = vpop.f32.mrb[0].mxu0
  %v296 = vadd.f32 %v183, %v295
  %v297 = vpop.f32.mrb[0].mxu0
  %298 = vmatprep.mubr.f32.mxu0 0.0
  %299 = vmatmul.mubr.f32.gmra.mrb[0].mxu0 %v199
  %v300 = vpop.f32.mrb[0].mxu0
  %v301 = vadd.f32 %v183, %v300
  %v302 = vpop.f32.mrb[0].mxu0
  %303 = vmatprep.mubr.f32.mxu0 0.0
  %304 = vmatmul.mubr.f32.gmra.mrb[0].mxu0 %v202
  %v305 = vpop.f32.mrb[0].mxu0
  %v306 = vadd.f32 %v183, %v305
  %v307 = vpop.f32.mrb[0].mxu0
  %308 = vmatprep.mubr.f32.mxu0 0.0
  %309 = vmatmul.mubr.f32.gmra.mrb[0].mxu0 %v205
  %v310 = vpop.f32.mrb[0].mxu0
  %v311 = vadd.f32 %v183, %v310
  %v312 = vpop.f32.mrb[0].mxu0
  %313 = vmatprep.mubr.f32.mxu0 0.0
  %314 = vmatmul.mubr.f32.gmra.mrb[0].mxu0 %v208
  %v315 = vpop.f32.mrb[0].mxu0
  %v316 = vadd.f32 %v183, %v315
  %v317 = vpop.f32.mrb[0].mxu0
  %318 = vdwg.mxu0
  %v319 = vld [vmem:[%s4] sm:$0xff]
  %v320 = vld [vmem:[%s4 + $0x8] sm:$0xff]
  %v321 = vld [vmem:[%s4 + $0x10] sm:$0xff]
  %v322 = vld [vmem:[%s4 + $0x18] sm:$0xff]
  %v323 = vld [vmem:[%s4 + $0x20] sm:$0xff]
  %v324 = vld [vmem:[%s4 + $0x28] sm:$0xff]
  %v325 = vld [vmem:[%s4 + $0x30] sm:$0xff]
  %v326 = vld [vmem:[%s4 + $0x38] sm:$0xff]
  %vm327 = vcmp.ge.f32.partialorder %v319, 0.2
  %vm328 = vcmp.ge.f32.partialorder %v320, 0.2
  %vm329 = vcmp.ge.f32.partialorder %v321, 0.2
  %vm330 = vcmp.ge.f32.partialorder %v322, 0.2
  %vm331 = vcmp.ge.f32.partialorder %v323, 0.2
  %vm332 = vcmp.ge.f32.partialorder %v324, 0.2
  %vm333 = vcmp.ge.f32.partialorder %v325, 0.2
  %vm334 = vcmp.ge.f32.partialorder %v326, 0.2
  %v335 = vsel %vm327, %v281, 0.0
  %v336 = vsel %vm328, %v286, 0.0
  %v337 = vsel %vm329, %v291, 0.0
  %v338 = vsel %vm330, %v296, 0.0
  %v339 = vsel %vm331, %v301, 0.0
  %v340 = vsel %vm332, %v306, 0.0
  %v341 = vsel %vm333, %v311, 0.0
  %v342 = vsel %vm334, %v316, 0.0
  %v343 = vld [vmem:[%s5] sm:$0xff]
  %v344 = vld [vmem:[%s5 + $0x8] sm:$0xff]
  %v345 = vld [vmem:[%s5 + $0x10] sm:$0xff]
  %v346 = vld [vmem:[%s5 + $0x18] sm:$0xff]
  %v347 = vld [vmem:[%s5 + $0x20] sm:$0xff]
  %v348 = vld [vmem:[%s5 + $0x28] sm:$0xff]
  %v349 = vld [vmem:[%s5 + $0x30] sm:$0xff]
  %v350 = vld [vmem:[%s5 + $0x38] sm:$0xff]
  %v351 = vld [vmem:[%s5 + $0x40] sm:$0xff]
  %v352 = vld [vmem:[%s5 + $0x48] sm:$0xff]
  %v353 = vld [vmem:[%s5 + $0x50] sm:$0xff]
  %v354 = vld [vmem:[%s5 + $0x58] sm:$0xff]
  %v355 = vld [vmem:[%s5 + $0x60] sm:$0xf]
  %v357 = vsel %vm185, %v335, 0
  %v360 = vsel %vm185, %v336, 0
  %v363 = vsel %vm185, %v337, 0
  %v366 = vsel %vm185, %v338, 0
  %v369 = vsel %vm185, %v339, 0
  %v372 = vsel %vm185, %v340, 0
  %v375 = vsel %vm185, %v341, 0
  %v378 = vsel %vm185, %v342, 0
  %v381 = vsel %vm210, %v355, 0
  %383 = vmatprep.subr.mxu0 0.0
  %384 = vmatpush1.msra.mxu0 %v343
  %385 = vmatprep.subr.mxu0 0.0
  %386 = vmatpush1.msra.mxu0 %v344
  %387 = vmatprep.subr.mxu0 0.0
  %388 = vmatpush1.msra.mxu0 %v345
  %389 = vmatprep.subr.mxu0 0.0
  %390 = vmatpush1.msra.mxu0 %v346
  %391 = vmatprep.subr.mxu0 0.0
  %392 = vmatpush1.msra.mxu0 %v347
  %393 = vmatprep.subr.mxu0 0.0
  %394 = vmatpush1.msra.mxu0 %v348
  %395 = vmatprep.subr.mxu0 0.0
  %396 = vmatpush1.msra.mxu0 %v349
  %397 = vmatprep.subr.mxu0 0.0
  %398 = vmatpush1.msra.mxu0 %v350
  %399 = vmatprep.subr.mxu0 0.0
  %400 = vmatpush1.msra.mxu0 %v351
  %401 = vmatprep.subr.mxu0 0.0
  %402 = vmatpush1.msra.mxu0 %v352
  %403 = vmatprep.subr.mxu0 0.0
  %404 = vmatpush1.msra.mxu0 %v353
  %405 = vmatprep.subr.mxu0 0.0
  %406 = vmatpush1.msra.mxu0 %v354
  %407 = vmatprep.subr.mxu0 0.0
  %408 = vmatpush1.msra.mxu0 %v381
  %409 = vmatprep.subr.mxu0 0.0
  %410 = vmatpush1.msra.mxu0 0.0
  %411 = vmatprep.subr.mxu0 0.0
  %412 = vmatpush1.msra.mxu0 0.0
  %413 = vmatprep.subr.mxu0 0.0
  %414 = vmatpush1.msra.mxu0 0.0
  %415 = vmatprep.subr.mxu0 0.0
  %416 = vmatpush1.msra.mxu0 0.0
  %417 = vmatprep.subr.mxu0 0.0
  %418 = vmatpush1.msra.mxu0 0.0
  %419 = vmatprep.subr.mxu0 0.0
  %420 = vmatpush1.msra.mxu0 0.0
  %421 = vmatprep.subr.mxu0 0.0
  %422 = vmatpush1.msra.mxu0 0.0
  %423 = vmatprep.subr.mxu0 0.0
  %424 = vmatpush1.msra.mxu0 0.0
  %425 = vmatprep.subr.mxu0 0.0
  %426 = vmatpush1.msra.mxu0 0.0
  %427 = vmatprep.subr.mxu0 0.0
  %428 = vmatpush1.msra.mxu0 0.0
  %429 = vmatprep.subr.mxu0 0.0
  %430 = vmatpush1.msra.mxu0 0.0
  %431 = vmatprep.subr.mxu0 0.0
  %432 = vmatpush1.msra.mxu0 0.0
  %433 = vmatprep.subr.mxu0 0.0
  %434 = vmatpush1.msra.mxu0 0.0
  %435 = vmatprep.subr.mxu0 0.0
  %436 = vmatpush1.msra.mxu0 0.0
  %437 = vmatprep.subr.mxu0 0.0
  %438 = vmatpush1.msra.mxu0 0.0
  %439 = vmatprep.subr.mxu0 0.0
  %440 = vmatpush1.msra.mxu0 0.0
  %441 = vmatprep.subr.mxu0 0.0
  %442 = vmatpush1.msra.mxu0 0.0
  %443 = vmatprep.subr.mxu0 0.0
  %444 = vmatpush1.msra.mxu0 0.0
  %445 = vmatprep.subr.mxu0 0.0
  %446 = vmatpush1.msra.mxu0 0.0
  %447 = vmatprep.mubr.f32.mxu0 0.0
  %448 = vmatmul.mubr.f32.gmra.mrb[0].mxu0 %v357
  %v449 = vpop.f32.mrb[0].mxu0
  %v450 = vadd.f32 0.0, %v449
  %v451 = vpop.f32.mrb[0].mxu0
  %452 = vmatprep.mubr.f32.mxu0 0.0
  %453 = vmatmul.mubr.f32.gmra.mrb[0].mxu0 %v360
  %v454 = vpop.f32.mrb[0].mxu0
  %v455 = vadd.f32 0.0, %v454
  %v456 = vpop.f32.mrb[0].mxu0
  %457 = vmatprep.mubr.f32.mxu0 0.0
  %458 = vmatmul.mubr.f32.gmra.mrb[0].mxu0 %v363
  %v459 = vpop.f32.mrb[0].mxu0
  %v460 = vadd.f32 0.0, %v459
  %v461 = vpop.f32.mrb[0].mxu0
  %462 = vmatprep.mubr.f32.mxu0 0.0
  %463 = vmatmul.mubr.f32.gmra.mrb[0].mxu0 %v366
  %v464 = vpop.f32.mrb[0].mxu0
  %v465 = vadd.f32 0.0, %v464
  %v466 = vpop.f32.mrb[0].mxu0
  %467 = vmatprep.mubr.f32.mxu0 0.0
  %468 = vmatmul.mubr.f32.gmra.mrb[0].mxu0 %v369
  %v469 = vpop.f32.mrb[0].mxu0
  %v470 = vadd.f32 0.0, %v469
  %v471 = vpop.f32.mrb[0].mxu0
  %472 = vmatprep.mubr.f32.mxu0 0.0
  %473 = vmatmul.mubr.f32.gmra.mrb[0].mxu0 %v372
  %v474 = vpop.f32.mrb[0].mxu0
  %v475 = vadd.f32 0.0, %v474
  %v476 = vpop.f32.mrb[0].mxu0
  %477 = vmatprep.mubr.f32.mxu0 0.0
  %478 = vmatmul.mubr.f32.gmra.mrb[0].mxu0 %v375
  %v479 = vpop.f32.mrb[0].mxu0
  %v480 = vadd.f32 0.0, %v479
  %v481 = vpop.f32.mrb[0].mxu0
  %482 = vmatprep.mubr.f32.mxu0 0.0
  %483 = vmatmul.mubr.f32.gmra.mrb[0].mxu0 %v378
  %v484 = vpop.f32.mrb[0].mxu0
  %v485 = vadd.f32 0.0, %v484
  %v486 = vpop.f32.mrb[0].mxu0
  %487 = vdwg.mxu0
  %488 = vst [vmem:[%s6] sm:$0xff] %v450
  %489 = vst [vmem:[%s6 + $0x8] sm:$0xff] %v455
  %490 = vst [vmem:[%s6 + $0x10] sm:$0xff] %v460
  %491 = vst [vmem:[%s6 + $0x18] sm:$0xff] %v465
  %492 = vst [vmem:[%s6 + $0x20] sm:$0xff] %v470
  %493 = vst [vmem:[%s6 + $0x28] sm:$0xff] %v475
  %494 = vst [vmem:[%s6 + $0x30] sm:$0xff] %v480
  %495 = vst [vmem:[%s6 + $0x38] sm:$0xff] %v485
  // Predicated region
  $region26: #{model_forward.1} parent=0 // pred_check
    _
  $region27: #{model_forward.1} parent=0 // pred_check_branch
    %497 = sbr.rel (0) target = $region29
  $region28: #{model_forward.1} parent=0 // pred_region
    _
  $region29: #{model_forward.1} parent=0 // pred_fallthru
    _
  // Predicated region
  $region30: #{model_forward.1} parent=0 // pred_check
    _
  $region31: #{model_forward.1} parent=0 // pred_check_branch
    %499 = sbr.rel (0) target = $region33
  $region32: #{model_forward.1} parent=0 // pred_region
    _
  $region33: #{model_forward.1} parent=0 // pred_fallthru
    _

</llo_original>
